<compile_context>
chip_gen: v5e
topology: v5e:2x2
jax: 0.10.0
libtpu: 0.0.40
codegen_flags: <defaults>
</compile_context>

<pallas_src>
import functools

import jax
import jax.numpy as jnp
from jax.experimental import pallas as pl
from jax.experimental.pallas import tpu as pltpu


def _round_up(x: int, m: int) -> int:
    return (x + m - 1) // m * m


def _focal_loss_kernel(logits_ref, targets_ref, out_ref, acc_ref, *,
                       gamma: float, n_valid: int, n_inner: int):
    o = pl.program_id(0)
    i = pl.program_id(1)

    @pl.when(i == 0)
    def _():
        acc_ref[...] = jnp.zeros_like(acc_ref)

    x = logits_ref[...].astype(jnp.float32)            # (tn, C) f32
    t = targets_ref[...]                                # (tn, 1) int32
    tn, c = x.shape

    # Numerically stable logsumexp along the class (lane) axis.
    m = jnp.max(x, axis=-1, keepdims=True)              # (tn, 1)
    e = jnp.exp(x - m)                                   # single tn*C exp pass
    lse = jnp.log(jnp.sum(e, axis=-1, keepdims=True))    # (tn, 1)

    # Gather the target-class logit with compare + select (no float one-hot).
    col = jax.lax.broadcasted_iota(jnp.int32, (tn, c), 1)
    x_t = jnp.sum(jnp.where(col == t, x, 0.0), axis=-1, keepdims=True)

    log_p_t = x_t - m - lse                               # (tn, 1)
    p_t = jnp.exp(log_p_t)                                # O(tn) exp only
    one_minus_p = 1.0 - p_t

    # Focal modulation weight (1 - p_t)^gamma.
    if float(gamma) == int(gamma) and 0 <= int(gamma) <= 8:
        # Integer gamma: repeated VALU multiply (no EUP log/exp; pow(0,0)=1).
        w = jnp.ones_like(one_minus_p)
        for _ in range(int(gamma)):
            w = w * one_minus_p
    else:
        w = jnp.power(one_minus_p, jnp.float32(gamma))

    per_row = -(w * log_p_t)                              # (tn, 1)

    # Mask rows past N (ragged last block / clamped overhang block). Use
    # where-select so garbage (even NaN/Inf) rows contribute exactly 0.
    base = (o * n_inner + i) * tn
    row = jax.lax.broadcasted_iota(jnp.int32, (tn, 1), 0) + base
    acc_ref[...] += jnp.where(row < n_valid, per_row, jnp.float32(0.0))

    @pl.when(i == n_inner - 1)
    def _():
        total = jnp.sum(acc_ref[...])                     # one reduce per outer block
        out_ref[...] = jnp.broadcast_to(total, out_ref.shape)


def _pick_tile_rows(n: int, c: int, itemsize: int, max_tile_rows=None) -> int:
    """Rows per tile, sized from a VMEM budget valid on v5e / v6e / v7x."""
    c_lanes = _round_up(c, 128)
    # Per tile-row estimate: double-buffered native-dtype input block plus
    # ~6 live full-width f32 temporaries plus ~8 per-row (tn,1) arrays that
    # pad to 128 lanes each.
    bytes_per_row = c_lanes * (2 * itemsize + 6 * 4) + 8 * 512
    budget = 22 * 1024 * 1024          # comfortably under the 40 MiB scoped limit
    tn = int(budget // bytes_per_row)
    tn = min(tn, 8192)
    tn = max(16, (tn // 16) * 16)      # multiple of 16 -> works for bf16 too
    if max_tile_rows is not None:
        tn = min(tn, max(16, _round_up(int(max_tile_rows), 16)))
    if n <= tn:
        tn = n                          # single row tile; block dim == array dim
    return tn


def focal_loss(logits: jax.Array, targets: jax.Array, gamma: float = 2.0,
               max_tile_rows=None) -> jax.Array:
    """FocalLoss forward. logits: (N, C); targets: (N,) int. Returns f32 scalar."""
    n, c = logits.shape
    itemsize = jnp.dtype(logits.dtype).itemsize

    tn = _pick_tile_rows(n, c, itemsize, max_tile_rows)
    n_tiles = pl.cdiv(n, tn)
    # Outer "parallel" super-blocks: lets v7x split the rows across its two
    # TensorCores; on single-TC chips it just runs sequentially.
    n_outer = 2 if n_tiles >= 2 else 1
    n_inner = pl.cdiv(n_tiles, n_outer)

    t2 = targets.astype(jnp.int32).reshape(n, 1)

    def row_block_map(o, i):
        # Clamp the (possible) overhang block; its rows are masked in-kernel.
        return (jnp.minimum(o * n_inner + i, n_tiles - 1), 0)

    kernel = functools.partial(_focal_loss_kernel, gamma=gamma,
                               n_valid=n, n_inner=n_inner)

    partials = pl.pallas_call(
        kernel,
        out_shape=jax.ShapeDtypeStruct((n_outer, 8, 128), jnp.float32),
        grid=(n_outer, n_inner),
        in_specs=[
            # Native dtype, full-extent class axis (no pad / cast in HBM).
            pl.BlockSpec((tn, c), row_block_map),
            pl.BlockSpec((tn, 1), row_block_map),
        ],
        out_specs=pl.BlockSpec((1, 8, 128), lambda o, i: (o, 0, 0)),
        scratch_shapes=[pltpu.VMEM((tn, 1), jnp.float32)],
        compiler_params=pltpu.CompilerParams(
            dimension_semantics=("parallel", "arbitrary"),
            vmem_limit_bytes=40 * 1024 * 1024,   # < v7x's 64 MiB physical
        ),
    )(logits, t2)

    # reduction='mean' with weight=None -> divide by the true row count.
    return jnp.sum(partials[:, 0, 0]) / jnp.float32(n)


def focal_loss_ref(logits, targets, gamma=2.0):
    # Pure-JAX reference for a sanity check.
    log_prob = jax.nn.log_softmax(logits.astype(jnp.float32), axis=-1)
    prob = jnp.exp(log_prob)
    focal = (1.0 - prob) ** gamma * log_prob
    picked = jnp.take_along_axis(
        focal, targets[:, None].astype(jnp.int32), axis=-1)[:, 0]
    return jnp.mean(-picked)


if __name__ == "__main__":
    key = jax.random.PRNGKey(0)
    k1, k2, k3, k4, k5, k6 = jax.random.split(key, 6)

    # 1) Small shape consistent with the module defaults (classes=30).
    N, C = 8, 30
    logits = jax.random.normal(k1, (N, C), dtype=jnp.float32)
    targets = jax.random.randint(k2, (N,), 0, C, dtype=jnp.int32)
    loss = jax.block_until_ready(focal_loss(logits, targets, gamma=2.0))
    ref = focal_loss_ref(logits, targets, gamma=2.0)
    assert jnp.allclose(loss, ref, rtol=1e-5, atol=1e-5), (loss, ref)

    # 2) Multi-tile path: exercises the parallel outer axis, the ragged last
    #    block, the clamped overhang block, and the row-validity mask.
    N2, C2 = 40, 30
    logits2 = jax.random.normal(k3, (N2, C2), dtype=jnp.float32)
    targets2 = jax.random.randint(k4, (N2,), 0, C2, dtype=jnp.int32)
    loss2 = jax.block_until_ready(
        focal_loss(logits2, targets2, gamma=2.0, max_tile_rows=16))
    ref2 = focal_loss_ref(logits2, targets2, gamma=2.0)
    assert jnp.allclose(loss2, ref2, rtol=1e-5, atol=1e-5), (loss2, ref2)

    # 3) Native bf16 streaming (cast to f32 inside the kernel), multi-tile.
    N3, C3 = 50, 30
    logits3 = jax.random.normal(k5, (N3, C3), dtype=jnp.float32).astype(jnp.bfloat16)
    targets3 = jax.random.randint(k6, (N3,), 0, C3, dtype=jnp.int32)
    loss3 = jax.block_until_ready(
        focal_loss(logits3, targets3, gamma=2.0, max_tile_rows=32))
    ref3 = focal_loss_ref(logits3, targets3, gamma=2.0)
    assert jnp.allclose(loss3, ref3, rtol=1e-5, atol=1e-5), (loss3, ref3)

    print("KERNEL_OK")
</pallas_src>

<mosaic_0001>
module attributes {stable_mosaic.version = 11 : i64} {
  func.func @_focal_loss_kernel(%arg0: i32, %arg1: i32, %arg2: memref<8x30xf32, #tpu.memory_space<vmem>>, %arg3: memref<8x1xi32, #tpu.memory_space<vmem>>, %arg4: memref<1x8x128xf32, #tpu.memory_space<vmem>>, %arg5: memref<8x1xf32, #tpu.memory_space<vmem>>) attributes {dimension_semantics = [#tpu.dimension_semantics<parallel>, #tpu.dimension_semantics<arbitrary>], iteration_bounds = array<i64: 1, 1>, scalar_prefetch = 0 : i64, scratch_operands = 1 : i64, tpu.core_type = #tpu.core_type<tc>, window_params = [{transform_indices = @transform_0, window_bounds = array<i64: 8, 30>}, {transform_indices = @transform_1, window_bounds = array<i64: 8, 1>}, {transform_indices = @transform_2, window_bounds = array<i64: 1, 8, 128>}]} {
    %c0_i32 = arith.constant 0 : i32
    %0 = arith.cmpi eq, %arg1, %c0_i32 : i32
    %1 = arith.extui %0 : i1 to i32
    %c0_i32_0 = arith.constant 0 : i32
    %2 = arith.cmpi ne, %1, %c0_i32_0 : i32
    scf.if %2 {
      %cst_18 = arith.constant 0.000000e+00 : f32
      %47 = vector.broadcast %cst_18 : f32 to vector<8x1xf32>
      %c0_19 = arith.constant 0 : index
      %c0_20 = arith.constant 0 : index
      %48 = vector.load %arg5[%c0_19, %c0_20] : memref<8x1xf32, #tpu.memory_space<vmem>>, vector<8x1xf32>
      tpu.vector_store %arg5[%c0_19, %c0_20], %47 {strides = array<i32>} : memref<8x1xf32, #tpu.memory_space<vmem>>, vector<8x1xf32>,
    } else {
    }
    %c0 = arith.constant 0 : index
    %c0_1 = arith.constant 0 : index
    %3 = vector.load %arg2[%c0, %c0_1] : memref<8x30xf32, #tpu.memory_space<vmem>>, vector<8x30xf32>
    %c0_2 = arith.constant 0 : index
    %c0_3 = arith.constant 0 : index
    %4 = vector.load %arg3[%c0_2, %c0_3] : memref<8x1xi32, #tpu.memory_space<vmem>>, vector<8x1xi32>
    %cst = arith.constant dense<0xFF800000> : vector<8xf32>
    %5 = vector.multi_reduction <maximumf>, %3, %cst [1] : vector<8x30xf32> to vector<8xf32>
    %6 = vector.shape_cast %5 : vector<8xf32> to vector<8x1xf32>
    %7 = vector.broadcast %6 : vector<8x1xf32> to vector<8x30xf32>
    %8 = arith.subf %3, %7 : vector<8x30xf32>
    %9 = math.exp %8 : vector<8x30xf32>
    %cst_4 = arith.constant dense<0.000000e+00> : vector<8xf32>
    %10 = vector.multi_reduction <add>, %9, %cst_4 [1] : vector<8x30xf32> to vector<8xf32>
    %11 = vector.shape_cast %10 : vector<8xf32> to vector<8x1xf32>
    %12 = math.log %11 : vector<8x1xf32>
    %13 = tpu.iota {dimensions = array<i32: 1>} : vector<8x30xi32>
    %14 = vector.broadcast %4 : vector<8x1xi32> to vector<8x30xi32>
    %15 = arith.cmpi eq, %13, %14 : vector<8x30xi32>
    %cst_5 = arith.constant 0.000000e+00 : f32
    %16 = vector.broadcast %cst_5 : f32 to vector<8x30xf32>
    %17 = arith.select %15, %3, %16 : vector<8x30xi1>, vector<8x30xf32>
    %cst_6 = arith.constant dense<0.000000e+00> : vector<8xf32>
    %18 = vector.multi_reduction <add>, %17, %cst_6 [1] : vector<8x30xf32> to vector<8xf32>
    %19 = vector.shape_cast %18 : vector<8xf32> to vector<8x1xf32>
    %20 = arith.subf %19, %6 : vector<8x1xf32>
    %21 = arith.subf %20, %12 : vector<8x1xf32>
    %22 = math.exp %21 : vector<8x1xf32>
    %cst_7 = arith.constant 1.000000e+00 : f32
    %23 = vector.broadcast %cst_7 : f32 to vector<8x1xf32>
    %24 = arith.subf %23, %22 : vector<8x1xf32>
    %cst_8 = arith.constant 1.000000e+00 : f32
    %25 = vector.broadcast %cst_8 : f32 to vector<8x1xf32>
    %26 = arith.mulf %25, %24 : vector<8x1xf32>
    %27 = arith.mulf %26, %24 : vector<8x1xf32>
    %28 = arith.mulf %27, %21 : vector<8x1xf32>
    %cst_9 = arith.constant 0.000000e+00 : f32
    %29 = vector.broadcast %cst_9 : f32 to vector<8x1xf32>
    %30 = arith.subf %29, %28 : vector<8x1xf32>
    %c1_i32 = arith.constant 1 : i32
    %31 = arith.muli %arg0, %c1_i32 : i32
    %32 = arith.addi %31, %arg1 : i32
    %c8_i32 = arith.constant 8 : i32
    %33 = arith.muli %32, %c8_i32 : i32
    %34 = tpu.iota {dimensions = array<i32: 0>} : vector<8x1xi32>
    %35 = vector.broadcast %33 : i32 to vector<8x1xi32>
    %36 = arith.addi %34, %35 : vector<8x1xi32>
    %c0_10 = arith.constant 0 : index
    %c0_11 = arith.constant 0 : index
    %37 = vector.load %arg5[%c0_10, %c0_11] : memref<8x1xf32, #tpu.memory_space<vmem>>, vector<8x1xf32>
    %c8_i32_12 = arith.constant 8 : i32
    %38 = vector.broadcast %c8_i32_12 : i32 to vector<8x1xi32>
    %39 = arith.cmpi slt, %36, %38 : vector<8x1xi32>
    %cst_13 = arith.constant 0.000000e+00 : f32
    %40 = vector.broadcast %cst_13 : f32 to vector<8x1xf32>
    %41 = arith.select %39, %30, %40 : vector<8x1xi1>, vector<8x1xf32>
    %42 = arith.addf %37, %41 : vector<8x1xf32>
    %c0_14 = arith.constant 0 : index
    %c0_15 = arith.constant 0 : index
    %43 = vector.load %arg5[%c0_14, %c0_15] : memref<8x1xf32, #tpu.memory_space<vmem>>, vector<8x1xf32>
    tpu.vector_store %arg5[%c0_14, %c0_15], %42 {strides = array<i32>} : memref<8x1xf32, #tpu.memory_space<vmem>>, vector<8x1xf32>,
    %c0_i32_16 = arith.constant 0 : i32
    %44 = arith.cmpi eq, %arg1, %c0_i32_16 : i32
    %45 = arith.extui %44 : i1 to i32
    %c0_i32_17 = arith.constant 0 : i32
    %46 = arith.cmpi ne, %45, %c0_i32_17 : i32
    scf.if %46 {
      %c0_18 = arith.constant 0 : index
      %c0_19 = arith.constant 0 : index
      %47 = vector.load %arg5[%c0_18, %c0_19] : memref<8x1xf32, #tpu.memory_space<vmem>>, vector<8x1xf32>
      %48 = vector.shape_cast %47 : vector<8x1xf32> to vector<1x8x1xf32>
      %cst_20 = arith.constant dense<0.000000e+00> : vector<1xf32>
      %49 = vector.multi_reduction <add>, %48, %cst_20 [1, 2] : vector<1x8x1xf32> to vector<1xf32>
      %50 = vector.shape_cast %49 : vector<1xf32> to vector<1x1x1xf32>
      %51 = vector.extract %50[0, 0, 0] : f32 from vector<1x1x1xf32>
      %52 = vector.broadcast %51 : f32 to vector<1x8x128xf32>
      %c0_21 = arith.constant 0 : index
      %c0_22 = arith.constant 0 : index
      %c0_23 = arith.constant 0 : index
      %53 = vector.load %arg4[%c0_21, %c0_22, %c0_23] : memref<1x8x128xf32, #tpu.memory_space<vmem>>, vector<1x8x128xf32>
      tpu.vector_store %arg4[%c0_21, %c0_22, %c0_23], %52 {strides = array<i32>} : memref<1x8x128xf32, #tpu.memory_space<vmem>>, vector<1x8x128xf32>,
    } else {
    }
    return
  }
  func.func @transform_0(%arg0: i32, %arg1: i32) -> (i32, i32) {
    %c1_i32 = arith.constant 1 : i32
    %0 = arith.muli %arg0, %c1_i32 : i32
    %1 = arith.addi %0, %arg1 : i32
    %c0_i32 = arith.constant 0 : i32
    %2 = arith.minsi %1, %c0_i32 : i32
    %c0_i32_0 = arith.constant 0 : i32
    %c0_i32_1 = arith.constant 0 : i32
    return %2, %c0_i32_0 : i32, i32
  }
  func.func @transform_1(%arg0: i32, %arg1: i32) -> (i32, i32) {
    %c1_i32 = arith.constant 1 : i32
    %0 = arith.muli %arg0, %c1_i32 : i32
    %1 = arith.addi %0, %arg1 : i32
    %c0_i32 = arith.constant 0 : i32
    %2 = arith.minsi %1, %c0_i32 : i32
    %c0_i32_0 = arith.constant 0 : i32
    %c0_i32_1 = arith.constant 0 : i32
    return %2, %c0_i32_0 : i32, i32
  }
  func.func @transform_2(%arg0: i32, %arg1: i32) -> (i32, i32, i32) {
    %c0_i32 = arith.constant 0 : i32
    %c0_i32_0 = arith.constant 0 : i32
    %c0_i32_1 = arith.constant 0 : i32
    return %arg0, %c0_i32, %c0_i32_0 : i32, i32, i32
  }
}

</mosaic_0001>

<llo_original>
// kernel: tpu_custom_call.1
$region0: #{tpu_custom_call.1}
  #allocation0 [shape = 'u32[]', space=smem, size = 0x4, offset = 0x4, fixed_abs, tag = 'smem constant byte address 0x4 - core index']
  #allocation1 [shape = 'u32[72,128]{1,0:T(1,128)}', space=vmem, size = 0x9000, scoped, tag = 'internal scratch']
  #allocation2 [shape = 'f32[8,1]{1,0:T(8,128)}', space=vmem, size = 0x1000, scoped, tag = 'scratch operand']
  %s0 = inlined_call_operand.vmem [shape: f32[8,30], index: 0, kind: input, shape index: {}]
  %s1 = inlined_call_operand.vmem [shape: s32[8,1], index: 1, kind: input, shape index: {}]
  %s2 = inlined_call_operand.hbm [shape: f32[1,8,128], index: 2, kind: output, shape index: {}]
  %s3 = sld [smem:[#allocation0]]
  $region26: #{tpu_custom_call.1} parent=0
    _
  %s5 = ssub.s32 1, %s3
  %s6 = scalar_select 0, %s5, %s3
  $region1: #{tpu_custom_call.1} parent=0
    #allocation3 [shape = 'u8[4096]{0}', space=vmem, size = 0x1000, scoped, tag = 'output window, operand 0, single buffered']
    #allocation4 [shape = 's32[1]{0}', space=sflag, size = 0x4, scoped, tag = 'scoped memory for tpu_custom_call.1']
    %7 = vsyncpa [#allocation4], 0
    // Predicated region
    $region2: #{tpu_custom_call.1} parent=1 // pred_check
      _
    $region3: #{tpu_custom_call.1} parent=1 // pred_check_branch
      %9 = sbr.rel (0) target = $region5
    $region4: #{tpu_custom_call.1} parent=1 // pred_region
      %s10 = sadd.s32 0, 0
      %p11 = scmp.lt.s32.totalorder %s10, 0
      %s12 = scalar_select %p11, %s10, 0
      %p13 = scmp.lt.s32.totalorder %s12, 0
      %s14 = scalar_select %p13, %s12, 0
      %s15 = smul.addr %s14, 8
      %s16 = scalar_lea.vmem %s0, %s15
      %s17 = sadd.s32 0, 0
      %p18 = scmp.lt.s32.totalorder %s17, 0
      %s19 = scalar_select %p18, %s17, 0
    $region5: #{tpu_custom_call.1} parent=1 // pred_fallthru
      _
    // Predicated region
    $region6: #{tpu_custom_call.1} parent=1 // pred_check
      _
    $region7: #{tpu_custom_call.1} parent=1 // pred_check_branch
      %21 = sbr.rel (0) target = $region9
    $region8: #{tpu_custom_call.1} parent=1 // pred_region
      %s22 = sadd.s32 0, 0
      %p23 = scmp.lt.s32.totalorder %s22, 0
      %s24 = scalar_select %p23, %s22, 0
      %p25 = scmp.lt.s32.totalorder %s24, 0
      %s26 = scalar_select %p25, %s24, 0
      %s27 = smul.addr %s26, 8
      %s28 = scalar_lea.vmem %s1, %s27
      %s29 = sadd.s32 0, 0
      %p30 = scmp.lt.s32.totalorder %s29, 0
      %s31 = scalar_select %p30, %s29, 0
    $region9: #{tpu_custom_call.1} parent=1 // pred_fallthru
      _
    %s32 = sadd.s32 0, 0
    %p33 = scmp.lt.s32.totalorder %s32, 0
    %s34 = scalar_select %p33, %s32, 0
    %p35 = scmp.lt.s32.totalorder %s34, 0
    %s36 = scalar_select %p35, %s34, 0
    %s37 = smul.addr %s36, 8
    %s38 = scalar_lea.vmem %s0, %s37
    %s39 = sadd.s32 0, 0
    %p40 = scmp.lt.s32.totalorder %s39, 0
    %s41 = scalar_select %p40, %s39, 0
    %p42 = scmp.lt.s32.totalorder %s41, 0
    %s43 = scalar_select %p42, %s41, 0
    %s44 = smul.addr %s43, 8
    %s45 = scalar_lea.vmem %s1, %s44
    %s46 = sadd.s32 0, 0
    %p47 = scmp.lt.s32.totalorder %s46, 0
    %s48 = scalar_select %p47, %s46, 0
    %p49 = scmp.lt.s32.totalorder %s48, 0
    %s50 = scalar_select %p49, %s48, 0
    %s51 = smul.addr %s50, 8
    %s52 = scalar_lea.vmem %s0, %s51
    %s53 = sadd.s32 0, 0
    %p54 = scmp.lt.s32.totalorder %s53, 0
    %s55 = scalar_select %p54, %s53, 0
    %s56 = sadd.s32 0, 0
    %p57 = scmp.lt.s32.totalorder %s56, 0
    %s58 = scalar_select %p57, %s56, 0
    %p59 = scmp.lt.s32.totalorder %s58, 0
    %s60 = scalar_select %p59, %s58, 0
    %s61 = smul.addr %s60, 8
    %s62 = scalar_lea.vmem %s1, %s61
    %s63 = sadd.s32 0, 0
    %p64 = scmp.lt.s32.totalorder %s63, 0
    %s65 = scalar_select %p64, %s63, 0
    %p66 = scmp.eq.s32.totalorder 0, 0
    // Predicated region
    $region10: #{tpu_custom_call.1} parent=1 // pred_check
      %p67 = pneg %p66
    $region11: #{tpu_custom_call.1} parent=1 // pred_check_branch
      %69 = sbr.rel (%p67) target = $region13
    $region12: #{tpu_custom_call.1} parent=1 // pred_region
      %vm70 = vcmask 7168
      %71 = vst.msk [vmem:[#allocation2] sm:$0xff] %vm70, 0.0
    $region13: #{tpu_custom_call.1} parent=1 // pred_fallthru
      _
    %v72 = vld [vmem:[%s52] sm:$0xff]
    %v73 = vld [vmem:[%s62] sm:$0xff]
    %vm74 = vcmask 244736
    %v75 = vsel %vm74, %v72, -inf
    %76 = vmax.xlane.f32.xlu0 %v75
    %v77 = vpop.xlane.xlu0 %76
    %v78 = vsub.f32 %v72, %v77
    %v79 = vmul.f32 %v78, 1.442695
    %v80 = vpow.pop %v79
    %v81 = vsel %vm74, %v80, 0.0
    %82 = vadd.xlane.f32.xlu0 %v81
    %v83 = vpop.xlane.xlu0 %82
    %v84 = vlog2.pop %v83
    %v85 = vmul.f32 %v84, 0.6931472
    %v86 = vlaneseq
    %v87 = vand.u32 %v86, 127
    %88 = vset.pattern.permute.xlu0 0
    %89 = vperm.xlu0 %88, %v73
    %v90 = vpop.permute.xlu0 %89
    %vm91 = vcmp.eq.s32.totalorder %v87, %v90
    %v92 = vsel %vm91, %v72, 0.0
    %v93 = vsel %vm74, %v92, 0.0
    %94 = vadd.xlane.f32.xlu0 %v93
    %v95 = vpop.xlane.xlu0 %94
    %v96 = vsub.f32 %v95, %v77
    %v97 = vsub.f32 %v96, %v85
    %v98 = vmul.f32 %v97, 1.442695
    %v99 = vpow.pop %v98
    %v100 = vsub.f32 1.0, %v99
    %v101 = vmul.f32 %v100, %v100
    %v102 = vmul.f32 %v101, %v97
    %v103 = vsub.f32 0.0, %v102
    %s104 = sadd.s32 0, 0
    %s105 = smul.u32 %s104, 8
    %v106 = vlaneseq
    %v107 = vshrl.u32 %v106, 7
    %v108 = vstv %s105
    %v109 = vadd.s32 %v107, %v108
    %v110 = vld [vmem:[#allocation2] sm:$0xff]
    %vm111 = vcmp.lt.s32.totalorder %v109, 8
    %v112 = vsel %vm111, %v103, 0.0
    %v113 = vadd.f32 %v110, %v112
    %vm114 = vcmask 7168
    %115 = vst.msk [vmem:[#allocation2] sm:$0xff] %vm114, %v113
    // Predicated region
    $region14: #{tpu_custom_call.1} parent=1 // pred_check
      %p116 = pneg %p66
    $region15: #{tpu_custom_call.1} parent=1 // pred_check_branch
      %118 = sbr.rel (%p116) target = $region17
    $region16: #{tpu_custom_call.1} parent=1 // pred_region
      %v119 = vld [vmem:[#allocation2] sm:$0xff]
      %v120 = vsel %vm114, %v119, 0.0
      %121 = vadd.xlane.f32.xlu0 %v120
      %v122 = vpop.xlane.xlu0 %121
      %v123 = vrot.slane %v122, 4
      %v124 = vadd.f32 %v122, %v123
      %v125 = vrot.slane %v124, 2
      %v126 = vadd.f32 %v124, %v125
      %v127 = vrot.slane %v126, 1
      %v128 = vadd.f32 %v126, %v127
      %s129 = vtos %v128
      %v130 = vstv %s129
      %131 = vst [vmem:[#allocation3] sm:$0xff] %v130
    $region17: #{tpu_custom_call.1} parent=1 // pred_fallthru
      _
    // Predicated region
    $region18: #{tpu_custom_call.1} parent=1 // pred_check
      _
    $region19: #{tpu_custom_call.1} parent=1 // pred_check_branch
      %133 = sbr.rel (0) target = $region21
    $region20: #{tpu_custom_call.1} parent=1 // pred_region
      %135 = vsyncadd [#allocation4], 0
      %s137 = sshll.u32 [#allocation3], 4
      %s138 = int_to_ptr.vmem [resolvable:$true] %s137
      %s139 = sshll.u32 %s2, 4
      %s140 = int_to_ptr.hbm [resolvable:$true] %s139
      %142 = dma.vmem_to_hbm [thread:$0]  %s138, 128, %s140, [#allocation4]
    $region21: #{tpu_custom_call.1} parent=1 // pred_fallthru
      _
    // Predicated region
    $region22: #{tpu_custom_call.1} parent=1 // pred_check
      _
    $region23: #{tpu_custom_call.1} parent=1 // pred_check_branch
      %144 = sbr.rel (0) target = $region25
    $region24: #{tpu_custom_call.1} parent=1 // pred_region
      %146 = dma.done [#allocation4], 128
    $region25: #{tpu_custom_call.1} parent=1 // pred_fallthru
      _
    %147 = vsyncpa [#allocation4], 1

</llo_original>
